<compile_context>
chip_gen: v7x
topology: tpu7x:2x2x1
jax: 0.10.0
libtpu: 0.0.40
codegen_flags: <defaults>
</compile_context>

<pallas_src>
import jax
import jax.numpy as jnp
from jax.experimental import pallas as pl
from jax.experimental.pallas import tpu as pltpu

LANE = 128
SUBLANE = 8
MAX_CHUNK_ROWS = 1024   # 1024 x 128 f32 = 512 KiB per input block (x2 inputs x2 bufs = 2 MiB)


def _round_up(x, m):
    return ((x + m - 1) // m) * m


def _iou_kernel(p_ref, t_ref, out_ref, iand_acc, sum_acc):
    c = pl.program_id(1)
    nc = pl.num_programs(1)

    @pl.when(c == 0)
    def _():
        iand_acc[...] = jnp.zeros_like(iand_acc)
        sum_acc[...] = jnp.zeros_like(sum_acc)

    p = p_ref[...].astype(jnp.float32)    # (1, chunk_rows, 128)
    t = t_ref[...].astype(jnp.float32)

    # VPU-only partial accumulation: reshape groups consecutive sublanes into
    # (8, 128) vreg tiles (no cross-tile data movement), then vector-add them
    # into the resident accumulators. Cross-lane reduce is deferred to the end.
    prod = (p * t).reshape(-1, SUBLANE, LANE)
    both = (p + t).reshape(-1, SUBLANE, LANE)
    iand_acc[...] += jnp.sum(prod, axis=0)
    sum_acc[...] += jnp.sum(both, axis=0)

    @pl.when(c == nc - 1)
    def _():
        iand = jnp.sum(iand_acc[...])
        total = jnp.sum(sum_acc[...])          # sum(p) + sum(t)
        ior = total - iand
        # NOTE: Ior == 0 (both inputs all-zero) yields inf/nan, matching the
        # PyTorch reference exactly.
        term = jnp.float32(1.0) - iand / ior
        out_ref[...] = term + jnp.zeros_like(out_ref)


def iou_loss(pred, target, *, max_chunk_rows=MAX_CHUNK_ROWS):
    """Pallas implementation of IOU().forward(pred, target). Returns a scalar."""
    assert pred.shape == target.shape and pred.ndim == 4
    B, C, H, W = pred.shape
    N = C * H * W

    # Lane-dense layout: flatten per-batch to multiples of (chunk_rows x 128).
    rows = pl.cdiv(N, LANE)
    chunk_rows = min(max_chunk_rows, _round_up(rows, 2 * SUBLANE))  # mult of 16 (bf16-safe)
    rows_padded = _round_up(rows, chunk_rows)
    n_chunks = rows_padded // chunk_rows
    n_pad = rows_padded * LANE

    p2 = pred.reshape(B, N)
    t2 = target.reshape(B, N)
    if n_pad != N:
        pad = n_pad - N
        # Zero padding is exact: adds nothing to Iand, sum(p) or sum(t).
        p2 = jnp.pad(p2, ((0, 0), (0, pad)))
        t2 = jnp.pad(t2, ((0, 0), (0, pad)))
    p3 = p2.reshape(B, rows_padded, LANE)
    t3 = t2.reshape(B, rows_padded, LANE)

    itemsize = jnp.dtype(pred.dtype).itemsize
    cost = pl.CostEstimate(
        flops=4 * B * n_pad,
        transcendentals=0,
        bytes_accessed=2 * B * n_pad * itemsize + B * SUBLANE * LANE * 4,
    )

    terms = pl.pallas_call(
        _iou_kernel,
        out_shape=jax.ShapeDtypeStruct((B, SUBLANE, LANE), jnp.float32),
        grid_spec=pltpu.PrefetchScalarGridSpec(
            num_scalar_prefetch=0,
            grid=(B, n_chunks),
            in_specs=[
                pl.BlockSpec((1, chunk_rows, LANE), lambda b, c: (b, c, 0)),
                pl.BlockSpec((1, chunk_rows, LANE), lambda b, c: (b, c, 0)),
            ],
            out_specs=pl.BlockSpec((1, SUBLANE, LANE), lambda b, c: (b, 0, 0)),
            scratch_shapes=[
                pltpu.VMEM((SUBLANE, LANE), jnp.float32),
                pltpu.VMEM((SUBLANE, LANE), jnp.float32),
            ],
        ),
        compiler_params=pltpu.CompilerParams(
            dimension_semantics=("parallel", "arbitrary"),
        ),
        cost_estimate=cost,
    )(p3, t3)

    # Per-batch terms live (broadcast) in lane-dense blocks; pick one element
    # each, then do the tiny final reduction + divide-by-B on the host side.
    return jnp.sum(terms[:, 0, 0]) / jnp.float32(B)


def _iou_reference(pred, target):
    # pure-JAX reference mirroring the PyTorch loop
    b = pred.shape[0]
    iand = jnp.sum(pred * target, axis=(1, 2, 3))
    ior = jnp.sum(target, axis=(1, 2, 3)) + jnp.sum(pred, axis=(1, 2, 3)) - iand
    return jnp.sum(1.0 - iand / ior) / b


if __name__ == "__main__":
    key = jax.random.PRNGKey(0)
    k1, k2 = jax.random.split(key)
    B, C, H, W = 2, 4, 16, 16
    # pred like sigmoid outputs, target like soft masks (strictly positive so Ior > 0)
    pred = jax.random.uniform(k1, (B, C, H, W), dtype=jnp.float32)
    target = jax.random.uniform(k2, (B, C, H, W), dtype=jnp.float32)

    loss = iou_loss(pred, target)
    jax.block_until_ready(loss)

    ref = _iou_reference(pred, target)
    assert jnp.allclose(loss, ref, rtol=1e-5, atol=1e-5), (loss, ref)

    print("KERNEL_OK")
</pallas_src>

<mosaic_0001>
module attributes {stable_mosaic.version = 11 : i64} {
  func.func @_iou_kernel(%arg0: i32, %arg1: i32, %arg2: memref<1x16x128xf32, #tpu.memory_space<vmem>>, %arg3: memref<1x16x128xf32, #tpu.memory_space<vmem>>, %arg4: memref<1x8x128xf32, #tpu.memory_space<vmem>>, %arg5: memref<8x128xf32, #tpu.memory_space<vmem>>, %arg6: memref<8x128xf32, #tpu.memory_space<vmem>>) attributes {dimension_semantics = [#tpu.dimension_semantics<parallel>, #tpu.dimension_semantics<arbitrary>], iteration_bounds = array<i64: 2, 1>, scalar_prefetch = 0 : i64, scratch_operands = 2 : i64, tpu.core_type = #tpu.core_type<tc>, window_params = [{transform_indices = @transform_0, window_bounds = array<i64: 1, 16, 128>}, {transform_indices = @transform_1, window_bounds = array<i64: 1, 16, 128>}, {transform_indices = @transform_2, window_bounds = array<i64: 1, 8, 128>}]} {
    %c0_i32 = arith.constant 0 : i32
    %0 = arith.cmpi eq, %arg1, %c0_i32 : i32
    %1 = arith.extui %0 : i1 to i32
    %c0_i32_0 = arith.constant 0 : i32
    %2 = arith.cmpi ne, %1, %c0_i32_0 : i32
    scf.if %2 {
      %cst_17 = arith.constant 0.000000e+00 : f32
      %20 = vector.broadcast %cst_17 : f32 to vector<8x128xf32>
      %c0_18 = arith.constant 0 : index
      %c0_19 = arith.constant 0 : index
      %21 = vector.load %arg5[%c0_18, %c0_19] : memref<8x128xf32, #tpu.memory_space<vmem>>, vector<8x128xf32>
      tpu.vector_store %arg5[%c0_18, %c0_19], %20 {strides = array<i32>} : memref<8x128xf32, #tpu.memory_space<vmem>>, vector<8x128xf32>,
      %cst_20 = arith.constant 0.000000e+00 : f32
      %22 = vector.broadcast %cst_20 : f32 to vector<8x128xf32>
      %c0_21 = arith.constant 0 : index
      %c0_22 = arith.constant 0 : index
      %23 = vector.load %arg6[%c0_21, %c0_22] : memref<8x128xf32, #tpu.memory_space<vmem>>, vector<8x128xf32>
      tpu.vector_store %arg6[%c0_21, %c0_22], %22 {strides = array<i32>} : memref<8x128xf32, #tpu.memory_space<vmem>>, vector<8x128xf32>,
    } else {
    }
    %c0 = arith.constant 0 : index
    %c0_1 = arith.constant 0 : index
    %c0_2 = arith.constant 0 : index
    %3 = vector.load %arg2[%c0, %c0_1, %c0_2] : memref<1x16x128xf32, #tpu.memory_space<vmem>>, vector<1x16x128xf32>
    %c0_3 = arith.constant 0 : index
    %c0_4 = arith.constant 0 : index
    %c0_5 = arith.constant 0 : index
    %4 = vector.load %arg3[%c0_3, %c0_4, %c0_5] : memref<1x16x128xf32, #tpu.memory_space<vmem>>, vector<1x16x128xf32>
    %5 = arith.mulf %3, %4 : vector<1x16x128xf32>
    %6 = vector.shape_cast %5 : vector<1x16x128xf32> to vector<2x8x128xf32>
    %7 = arith.addf %3, %4 : vector<1x16x128xf32>
    %8 = vector.shape_cast %7 : vector<1x16x128xf32> to vector<2x8x128xf32>
    %c0_6 = arith.constant 0 : index
    %c0_7 = arith.constant 0 : index
    %9 = vector.load %arg5[%c0_6, %c0_7] : memref<8x128xf32, #tpu.memory_space<vmem>>, vector<8x128xf32>
    %cst = arith.constant dense<0.000000e+00> : vector<8x128xf32>
    %10 = vector.multi_reduction <add>, %6, %cst [0] : vector<2x8x128xf32> to vector<8x128xf32>
    %11 = arith.addf %9, %10 : vector<8x128xf32>
    %c0_8 = arith.constant 0 : index
    %c0_9 = arith.constant 0 : index
    %12 = vector.load %arg5[%c0_8, %c0_9] : memref<8x128xf32, #tpu.memory_space<vmem>>, vector<8x128xf32>
    tpu.vector_store %arg5[%c0_8, %c0_9], %11 {strides = array<i32>} : memref<8x128xf32, #tpu.memory_space<vmem>>, vector<8x128xf32>,
    %c0_10 = arith.constant 0 : index
    %c0_11 = arith.constant 0 : index
    %13 = vector.load %arg6[%c0_10, %c0_11] : memref<8x128xf32, #tpu.memory_space<vmem>>, vector<8x128xf32>
    %cst_12 = arith.constant dense<0.000000e+00> : vector<8x128xf32>
    %14 = vector.multi_reduction <add>, %8, %cst_12 [0] : vector<2x8x128xf32> to vector<8x128xf32>
    %15 = arith.addf %13, %14 : vector<8x128xf32>
    %c0_13 = arith.constant 0 : index
    %c0_14 = arith.constant 0 : index
    %16 = vector.load %arg6[%c0_13, %c0_14] : memref<8x128xf32, #tpu.memory_space<vmem>>, vector<8x128xf32>
    tpu.vector_store %arg6[%c0_13, %c0_14], %15 {strides = array<i32>} : memref<8x128xf32, #tpu.memory_space<vmem>>, vector<8x128xf32>,
    %c0_i32_15 = arith.constant 0 : i32
    %17 = arith.cmpi eq, %arg1, %c0_i32_15 : i32
    %18 = arith.extui %17 : i1 to i32
    %c0_i32_16 = arith.constant 0 : i32
    %19 = arith.cmpi ne, %18, %c0_i32_16 : i32
    scf.if %19 {
      %c0_17 = arith.constant 0 : index
      %c0_18 = arith.constant 0 : index
      %20 = vector.load %arg5[%c0_17, %c0_18] : memref<8x128xf32, #tpu.memory_space<vmem>>, vector<8x128xf32>
      %21 = vector.shape_cast %20 : vector<8x128xf32> to vector<1x8x128xf32>
      %cst_19 = arith.constant dense<0.000000e+00> : vector<1xf32>
      %22 = vector.multi_reduction <add>, %21, %cst_19 [1, 2] : vector<1x8x128xf32> to vector<1xf32>
      %23 = vector.shape_cast %22 : vector<1xf32> to vector<1x1x1xf32>
      %24 = vector.extract %23[0, 0, 0] : f32 from vector<1x1x1xf32>
      %c0_20 = arith.constant 0 : index
      %c0_21 = arith.constant 0 : index
      %25 = vector.load %arg6[%c0_20, %c0_21] : memref<8x128xf32, #tpu.memory_space<vmem>>, vector<8x128xf32>
      %26 = vector.shape_cast %25 : vector<8x128xf32> to vector<1x8x128xf32>
      %cst_22 = arith.constant dense<0.000000e+00> : vector<1xf32>
      %27 = vector.multi_reduction <add>, %26, %cst_22 [1, 2] : vector<1x8x128xf32> to vector<1xf32>
      %28 = vector.shape_cast %27 : vector<1xf32> to vector<1x1x1xf32>
      %29 = vector.extract %28[0, 0, 0] : f32 from vector<1x1x1xf32>
      %30 = arith.subf %29, %24 : f32
      %31 = arith.divf %24, %30 : f32
      %cst_23 = arith.constant 1.000000e+00 : f32
      %32 = arith.subf %cst_23, %31 : f32
      %cst_24 = arith.constant 0.000000e+00 : f32
      %33 = vector.broadcast %cst_24 : f32 to vector<1x8x128xf32>
      %34 = vector.broadcast %32 : f32 to vector<1x8x128xf32>
      %35 = arith.addf %34, %33 : vector<1x8x128xf32>
      %c0_25 = arith.constant 0 : index
      %c0_26 = arith.constant 0 : index
      %c0_27 = arith.constant 0 : index
      %36 = vector.load %arg4[%c0_25, %c0_26, %c0_27] : memref<1x8x128xf32, #tpu.memory_space<vmem>>, vector<1x8x128xf32>
      tpu.vector_store %arg4[%c0_25, %c0_26, %c0_27], %35 {strides = array<i32>} : memref<1x8x128xf32, #tpu.memory_space<vmem>>, vector<1x8x128xf32>,
    } else {
    }
    return
  }
  func.func @transform_0(%arg0: i32, %arg1: i32) -> (i32, i32, i32) {
    %c0_i32 = arith.constant 0 : i32
    %c0_i32_0 = arith.constant 0 : i32
    return %arg0, %arg1, %c0_i32 : i32, i32, i32
  }
  func.func @transform_1(%arg0: i32, %arg1: i32) -> (i32, i32, i32) {
    %c0_i32 = arith.constant 0 : i32
    %c0_i32_0 = arith.constant 0 : i32
    return %arg0, %arg1, %c0_i32 : i32, i32, i32
  }
  func.func @transform_2(%arg0: i32, %arg1: i32) -> (i32, i32, i32) {
    %c0_i32 = arith.constant 0 : i32
    %c0_i32_0 = arith.constant 0 : i32
    %c0_i32_1 = arith.constant 0 : i32
    return %arg0, %c0_i32, %c0_i32_0 : i32, i32, i32
  }
}

</mosaic_0001>

<llo_original>
// kernel: tpu_custom_call.1
$region0: #{tpu_custom_call.1}
  #allocation0 [shape = 'u32[]', space=smem, size = 0x4, offset = 0x4, fixed_abs, tag = 'smem constant byte address 0x4 - core index']
  #allocation1 [shape = 'u32[144,128]{1,0:T(1,128)}', space=vmem, size = 0x12000, scoped, tag = 'internal scratch']
  #allocation2 [shape = 'f32[8,128]{1,0:T(8,128)}', space=vmem, size = 0x1000, scoped, tag = 'scratch operand']
  #allocation3 [shape = 'f32[8,128]{1,0:T(8,128)}', space=vmem, size = 0x1000, scoped, tag = 'scratch operand']
  %s0 = inlined_call_operand.hbm [shape: f32[2,16,128], index: 0, kind: input, shape index: {}]
  %s1 = inlined_call_operand.hbm [shape: f32[2,16,128], index: 1, kind: input, shape index: {}]
  %s2 = inlined_call_operand.hbm [shape: f32[2,8,128], index: 2, kind: output, shape index: {}]
  %s3 = sld [smem:[#allocation0]]
  $region57: #{tpu_custom_call.1} parent=0
    _
  %s5 = ssub.s32 1, %s3
  %s6 = scalar_select 0, %s5, %s3
  $region1: #{tpu_custom_call.1} parent=0
    #allocation4 [shape = 'u8[16384]{0}', space=vmem, size = 0x4000, scoped, tag = 'input window, operand 0']
    #allocation5 [shape = 's32[2]{0}', space=sflag, size = 0x8, scoped, tag = 'scoped memory for tpu_custom_call.1']
    #allocation6 [shape = 's32[2]{0}', space=sflag, size = 0x8, scoped, tag = 'scoped memory for tpu_custom_call.1']
    #allocation7 [shape = 'u8[16384]{0}', space=vmem, size = 0x4000, scoped, tag = 'input window, operand 1']
    #allocation8 [shape = 's32[2]{0}', space=sflag, size = 0x8, scoped, tag = 'scoped memory for tpu_custom_call.1']
    #allocation9 [shape = 'u8[8192]{0}', space=vmem, size = 0x2000, scoped, tag = 'output window, operand 0']
    %7 = vsyncpa [#allocation5], 0
    %s8 = scalar_lea.sflag [#allocation5], 1
    %9 = vsyncpa %s8, 0
    %10 = vsyncpa [#allocation8], 0
    %s11 = scalar_lea.sflag [#allocation8], 1
    %12 = vsyncpa %s11, 0
    %13 = vsyncpa [#allocation6], 0
    %s14 = scalar_lea.sflag [#allocation6], 1
    %15 = vsyncpa %s14, 0
    loop: start=0, step=1, limit=4
    $region2: #{tpu_custom_call.1} parent=1 // loop_pre_header
      _
    $region3: #{tpu_custom_call.1} parent=1 // loop_header
      %s17 = sphi 0, %s21
      %p18 = scmp.ge.s32.totalorder %s17, 4
      %s24 = sphi 0, %s36
      %s25 = sphi 0, %s32
      %s26 = sphi 0, %s24
      %s27 = sphi 0, %s25
      %s28 = sphi 0, %s26
      %s29 = sphi 0, %s27
      %s41 = sphi 0, %s43
      %s44 = sphi 0, %s41
      %s45 = sphi 0, %s44
      %s61 = sphi 0, %s45
      %s69 = sphi 0, %s71
      %s72 = sphi 0, %s69
      %s73 = sphi 0, %s72
      %s89 = sphi 0, %s73
      %s95 = sphi 0, %s97
      %s98 = sphi 0, %s95
      %s99 = sphi 0, %s98
      %s115 = sphi 0, %s99
    $region4: #{tpu_custom_call.1} parent=1 // loop_header_branch
      %20 = sbr.rel (%p18) target = $region8
    $region5: #{tpu_custom_call.1} parent=1 // loop_body
      %s22 = ssub.s32 %s17, 1
      %s23 = ssub.s32 %s17, 2
      %s30 = sadd.s32 1, %s25
      %p31 = scmp.ge.s32.totalorder %s30, 1
      %s32 = scalar_select %p31, 0, %s30
      %s33 = sadd.s32 1, %s24
      %s34 = scalar_select %p31, %s33, %s24
      %p35 = scmp.ge.s32.totalorder %s34, 2
      %s36 = scalar_select %p35, 0, %s34
      %s37 = ssub.s32 %s24, %s36
      %s38 = ssub.s32 %s25, %s32
      %s39 = sor.u32 %s37, %s38
      %p40 = scmp.eq.s32.totalorder %s39, 0
      %s42 = sadd.s32 %s41, 1
      %s43 = scalar_select %p40, %s41, %s42
      %p46 = pneg %p40
      %p47 = scmp.eq.s32.totalorder %s17, 1
      %p48 = por %p46, %p47
      %p49 = scmp.ne.s32.totalorder %s41, %s44
      %p50 = scmp.eq.s32.totalorder %s17, 0
      %p51 = por %p49, %p50
      %p52 = scmp.ne.s32.totalorder %s41, %s44
      %p53 = scmp.eq.s32.totalorder %s22, 1
      %p54 = por %p52, %p53
      %p55 = scmp.ne.s32.totalorder %s44, %s45
      %p56 = scmp.eq.s32.totalorder %s22, 0
      %p57 = por %p55, %p56
      %p58 = scmp.ne.s32.totalorder %s44, %s45
      %p59 = scmp.eq.s32.totalorder %s23, 1
      %p60 = por %p58, %p59
      %p62 = scmp.ne.s32.totalorder %s45, %s61
      %p63 = scmp.eq.s32.totalorder %s23, 0
      %p64 = por %p62, %p63
      %s65 = ssub.s32 %s24, %s36
      %s66 = ssub.s32 %s25, %s32
      %s67 = sor.u32 %s65, %s66
      %p68 = scmp.eq.s32.totalorder %s67, 0
      %s70 = sadd.s32 %s69, 1
      %s71 = scalar_select %p68, %s69, %s70
      %p74 = pneg %p68
      %p75 = scmp.eq.s32.totalorder %s17, 1
      %p76 = por %p74, %p75
      %p77 = scmp.ne.s32.totalorder %s69, %s72
      %p78 = scmp.eq.s32.totalorder %s17, 0
      %p79 = por %p77, %p78
      %p80 = scmp.ne.s32.totalorder %s69, %s72
      %p81 = scmp.eq.s32.totalorder %s22, 1
      %p82 = por %p80, %p81
      %p83 = scmp.ne.s32.totalorder %s72, %s73
      %p84 = scmp.eq.s32.totalorder %s22, 0
      %p85 = por %p83, %p84
      %p86 = scmp.ne.s32.totalorder %s72, %s73
      %p87 = scmp.eq.s32.totalorder %s23, 1
      %p88 = por %p86, %p87
      %p90 = scmp.ne.s32.totalorder %s73, %s89
      %p91 = scmp.eq.s32.totalorder %s23, 0
      %p92 = por %p90, %p91
      %s93 = ssub.s32 %s24, %s36
      %p94 = scmp.eq.s32.totalorder %s93, 0
      %s96 = sadd.s32 %s95, 1
      %s97 = scalar_select %p94, %s95, %s96
      %p100 = pneg %p94
      %p101 = scmp.eq.s32.totalorder %s17, 1
      %p102 = por %p100, %p101
      %p103 = scmp.ne.s32.totalorder %s95, %s98
      %p104 = scmp.eq.s32.totalorder %s17, 0
      %p105 = por %p103, %p104
      %p106 = scmp.ne.s32.totalorder %s95, %s98
      %p107 = scmp.eq.s32.totalorder %s22, 1
      %p108 = por %p106, %p107
      %p109 = scmp.ne.s32.totalorder %s98, %s99
      %p110 = scmp.eq.s32.totalorder %s22, 0
      %p111 = por %p109, %p110
      %p112 = scmp.ne.s32.totalorder %s98, %s99
      %p113 = scmp.eq.s32.totalorder %s23, 1
      %p114 = por %p112, %p113
      %p116 = scmp.ne.s32.totalorder %s99, %s115
      %p117 = scmp.eq.s32.totalorder %s23, 0
      %p118 = por %p116, %p117
      %p119 = scmp.le.s32.totalorder 1, %s17
      %p120 = scmp.lt.s32.totalorder %s17, 3
      %p121 = pnand %p119, %p120
      %p122 = pneg %p121
      // Predicated region
      $region9: #{tpu_custom_call.1} parent=5 // pred_check
        _
      $region10: #{tpu_custom_call.1} parent=5 // pred_check_branch
        %124 = sbr.rel (%p121) target = $region12
      $region11: #{tpu_custom_call.1} parent=5 // pred_region
        %s125 = ssub.s32 %s17, 1
      $region12: #{tpu_custom_call.1} parent=5 // pred_fallthru
        _
      %p126 = scmp.lt.s32.totalorder %s17, 2
      // Predicated region
      $region13: #{tpu_custom_call.1} parent=5 // pred_check
        %p127 = pneg %p126
      $region14: #{tpu_custom_call.1} parent=5 // pred_check_branch
        %129 = sbr.rel (%p127) target = $region16
      $region15: #{tpu_custom_call.1} parent=5 // pred_region
        // Predicated region
        $region17: #{tpu_custom_call.1} parent=15 // pred_check
          %p130 = pneg %p51
        $region18: #{tpu_custom_call.1} parent=15 // pred_check_branch
          %132 = sbr.rel (%p130) target = $region20
        $region19: #{tpu_custom_call.1} parent=15 // pred_region
          %s133 = sand.u32 %s41, 1
          %s134 = scalar_lea.sflag [#allocation5], %s133
          %s135 = sand.u32 %s41, 1
          %s136 = smul.addr %s135, 16
          %s137 = scalar_lea.vmem [#allocation4], %s136
          %s138 = smul.u32 2, %s25
          %s140 = ssub.s32 256, 256
          %141 = vsyncadd %s134, %s140
          %s142 = smul.addr %s24, 2
          %s143 = sadd.s32 %s138, %s142
          %s144 = smul.addr %s143, 128
          %s145 = scalar_lea.hbm %s0, %s144
          %s146 = sshll.u32 %s137, 4
          %s147 = int_to_ptr.vmem [resolvable:$true] %s146
          %152 = dma.hbm_to_vmem [thread:$0]  %s145, 256, %s147, %s134, 128, 128, 8
        $region20: #{tpu_custom_call.1} parent=15 // pred_fallthru
          _
        // Predicated region
        $region21: #{tpu_custom_call.1} parent=15 // pred_check
          %p153 = pneg %p79
        $region22: #{tpu_custom_call.1} parent=15 // pred_check_branch
          %155 = sbr.rel (%p153) target = $region24
        $region23: #{tpu_custom_call.1} parent=15 // pred_region
          %s156 = sand.u32 %s69, 1
          %s157 = scalar_lea.sflag [#allocation8], %s156
          %s158 = sand.u32 %s69, 1
          %s159 = smul.addr %s158, 16
          %s160 = scalar_lea.vmem [#allocation7], %s159
          %s161 = smul.u32 2, %s25
          %s163 = ssub.s32 256, 256
          %164 = vsyncadd %s157, %s163
          %s165 = smul.addr %s24, 2
          %s166 = sadd.s32 %s161, %s165
          %s167 = smul.addr %s166, 128
          %s168 = scalar_lea.hbm %s1, %s167
          %s169 = sshll.u32 %s160, 4
          %s170 = int_to_ptr.vmem [resolvable:$true] %s169
          %175 = dma.hbm_to_vmem [thread:$0]  %s168, 256, %s170, %s157, 128, 128, 8
        $region24: #{tpu_custom_call.1} parent=15 // pred_fallthru
          _
      $region16: #{tpu_custom_call.1} parent=5 // pred_fallthru
        _
      %p176 = scmp.le.s32.totalorder 1, %s17
      %p177 = scmp.lt.s32.totalorder %s17, 3
      %p178 = pnand %p176, %p177
      %p179 = pneg %p178
      // Predicated region
      $region25: #{tpu_custom_call.1} parent=5 // pred_check
        _
      $region26: #{tpu_custom_call.1} parent=5 // pred_check_branch
        %181 = sbr.rel (%p178) target = $region28
      $region27: #{tpu_custom_call.1} parent=5 // pred_region
        %s182 = ssub.s32 %s17, 1
        %s183 = sand.u32 %s44, 1
        %s184 = scalar_lea.sflag [#allocation5], %s183
        %s185 = sand.u32 %s44, 1
        %s186 = smul.addr %s185, 16
        %s187 = scalar_lea.vmem [#allocation4], %s186
        // Predicated region
        $region29: #{tpu_custom_call.1} parent=27 // pred_check
          %p188 = pneg %p57
        $region30: #{tpu_custom_call.1} parent=27 // pred_check_branch
          %190 = sbr.rel (%p188) target = $region32
        $region31: #{tpu_custom_call.1} parent=27 // pred_region
          %191 = dma.done %s184, 256
        $region32: #{tpu_custom_call.1} parent=27 // pred_fallthru
          _
        %s192 = sand.u32 %s72, 1
        %s193 = scalar_lea.sflag [#allocation8], %s192
        %s194 = sand.u32 %s72, 1
        %s195 = smul.addr %s194, 16
        %s196 = scalar_lea.vmem [#allocation7], %s195
        // Predicated region
        $region33: #{tpu_custom_call.1} parent=27 // pred_check
          %p197 = pneg %p85
        $region34: #{tpu_custom_call.1} parent=27 // pred_check_branch
          %199 = sbr.rel (%p197) target = $region36
        $region35: #{tpu_custom_call.1} parent=27 // pred_region
          %200 = dma.done %s193, 256
        $region36: #{tpu_custom_call.1} parent=27 // pred_fallthru
          _
        %s201 = sand.u32 %s44, 1
        %s202 = scalar_lea.sflag [#allocation5], %s201
        %s203 = sand.u32 %s44, 1
        %s204 = smul.addr %s203, 16
        %s205 = scalar_lea.vmem [#allocation4], %s204
        %p206 = pneg %p57
        %p207 = pneg %p54
        %s208 = sand.u32 %s72, 1
        %s209 = scalar_lea.sflag [#allocation8], %s208
        %s210 = sand.u32 %s72, 1
        %s211 = smul.addr %s210, 16
        %s212 = scalar_lea.vmem [#allocation7], %s211
        %p213 = pneg %p85
        %p214 = pneg %p82
        %p215 = pneg %p111
        %p216 = pneg %p108
        %s217 = sand.u32 %s98, 1
        %s218 = scalar_lea.sflag [#allocation6], %s217
        %s219 = sand.u32 %s98, 1
        %s220 = smul.addr %s219, 8
        %s221 = scalar_lea.vmem [#allocation9], %s220
        %s222 = smul.u32 2, %s27
        %s223 = smul.u32 2, %s27
        %p224 = scmp.eq.s32.totalorder %s27, 0
        // Predicated region
        $region37: #{tpu_custom_call.1} parent=27 // pred_check
          %p225 = pneg %p224
        $region38: #{tpu_custom_call.1} parent=27 // pred_check_branch
          %227 = sbr.rel (%p225) target = $region40
        $region39: #{tpu_custom_call.1} parent=27 // pred_region
          %228 = vst [vmem:[#allocation2] sm:$0xff] 0.0
          %229 = vst [vmem:[#allocation3] sm:$0xff] 0.0
        $region40: #{tpu_custom_call.1} parent=27 // pred_fallthru
          _
        %v230 = vld [vmem:[%s187] sm:$0xff]
        %v231 = vld [vmem:[%s187 + $0x8] sm:$0xff]
        %v232 = vld [vmem:[%s196] sm:$0xff]
        %v233 = vld [vmem:[%s196 + $0x8] sm:$0xff]
        %v234 = vmul.f32 %v230, %v232
        %v235 = vmul.f32 %v231, %v233
        %v236 = vadd.f32 %v230, %v232
        %v237 = vadd.f32 %v231, %v233
        %v238 = vld [vmem:[#allocation2] sm:$0xff]
        %v239 = vadd.f32 %v234, %v235
        %v240 = vadd.f32 %v238, %v239
        %241 = vst [vmem:[#allocation2] sm:$0xff] %v240
        %v242 = vld [vmem:[#allocation3] sm:$0xff]
        %v243 = vadd.f32 %v236, %v237
        %v244 = vadd.f32 %v242, %v243
        %245 = vst [vmem:[#allocation3] sm:$0xff] %v244
        // Predicated region
        $region41: #{tpu_custom_call.1} parent=27 // pred_check
          %p246 = pneg %p224
        $region42: #{tpu_custom_call.1} parent=27 // pred_check_branch
          %248 = sbr.rel (%p246) target = $region44
        $region43: #{tpu_custom_call.1} parent=27 // pred_region
          %v249 = vld [vmem:[#allocation2] sm:$0xff]
          %250 = vadd.xlane.f32.xlu0 %v249
          %v251 = vpop.xlane.xlu0 %250
          %v252 = vrot.slane %v251, 4
          %v253 = vadd.f32 %v251, %v252
          %v254 = vrot.slane %v253, 2
          %v255 = vadd.f32 %v253, %v254
          %v256 = vrot.slane %v255, 1
          %v257 = vadd.f32 %v255, %v256
          %s258 = vtos %v257
          %v259 = vld [vmem:[#allocation3] sm:$0xff]
          %260 = vadd.xlane.f32.xlu0 %v259
          %v261 = vpop.xlane.xlu0 %260
          %v262 = vrot.slane %v261, 4
          %v263 = vadd.f32 %v261, %v262
          %v264 = vrot.slane %v263, 2
          %v265 = vadd.f32 %v263, %v264
          %v266 = vrot.slane %v265, 1
          %v267 = vadd.f32 %v265, %v266
          %s268 = vtos %v267
          %s269 = ssub.f32 %s268, %s258
          %v270 = vstv %s269
          %v271 = vrcp.pop %v270
          %s272 = vtos %v271
          %s273 = smul.f32 %s258, %s272
          %s274 = ssub.f32 1.0, %s273
          %v275 = vstv %s274
          %v276 = vadd.f32 %v275, 0.0
          %277 = vst [vmem:[%s221] sm:$0xff] %v276
        $region44: #{tpu_custom_call.1} parent=27 // pred_fallthru
          _
        %s278 = sand.u32 %s98, 1
        %s279 = scalar_lea.sflag [#allocation6], %s278
        %s280 = sand.u32 %s98, 1
        %s281 = smul.addr %s280, 8
        %s282 = scalar_lea.vmem [#allocation9], %s281
        // Predicated region
        $region45: #{tpu_custom_call.1} parent=27 // pred_check
          %p283 = pneg %p108
        $region46: #{tpu_custom_call.1} parent=27 // pred_check_branch
          %285 = sbr.rel (%p283) target = $region48
        $region47: #{tpu_custom_call.1} parent=27 // pred_region
          %s287 = ssub.s32 128, 128
          %288 = vsyncadd %s279, %s287
          %s289 = smul.addr %s26, 128
          %s290 = scalar_lea.hbm %s2, %s289
          %s292 = sshll.u32 %s282, 4
          %s293 = int_to_ptr.vmem [resolvable:$true] %s292
          %295 = dma.vmem_to_hbm [thread:$0]  %s293, 128, %s290, %s279
        $region48: #{tpu_custom_call.1} parent=27 // pred_fallthru
          _
      $region28: #{tpu_custom_call.1} parent=5 // pred_fallthru
        _
      %p296 = scmp.le.s32.totalorder 2, %s17
      // Predicated region
      $region49: #{tpu_custom_call.1} parent=5 // pred_check
        %p297 = pneg %p296
      $region50: #{tpu_custom_call.1} parent=5 // pred_check_branch
        %299 = sbr.rel (%p297) target = $region52
      $region51: #{tpu_custom_call.1} parent=5 // pred_region
        %s300 = ssub.s32 %s17, 2
        // Predicated region
        $region53: #{tpu_custom_call.1} parent=51 // pred_check
          %p301 = pneg %p114
        $region54: #{tpu_custom_call.1} parent=51 // pred_check_branch
          %303 = sbr.rel (%p301) target = $region56
        $region55: #{tpu_custom_call.1} parent=51 // pred_region
          %s304 = sand.u32 %s99, 1
          %s305 = scalar_lea.sflag [#allocation6], %s304
          %s306 = sand.u32 %s99, 1
          %s307 = smul.addr %s306, 8
          %s308 = scalar_lea.vmem [#allocation9], %s307
          %309 = dma.done %s305, 128
        $region56: #{tpu_custom_call.1} parent=51 // pred_fallthru
          _
      $region52: #{tpu_custom_call.1} parent=5 // pred_fallthru
        _
    $region6: #{tpu_custom_call.1} parent=1 // loop_footer
      %s21 = sadd.s32 1, %s17
    $region7: #{tpu_custom_call.1} parent=1 // loop_footer_branch
      %16 = sbr.rel target = $region3
    $region8: #{tpu_custom_call.1} parent=1 // loop_exit
      _
    %310 = vsyncpa [#allocation5], 1
    %s311 = scalar_lea.sflag [#allocation5], 1
    %312 = vsyncpa %s311, 1
    %313 = vsyncpa [#allocation8], 1
    %s314 = scalar_lea.sflag [#allocation8], 1
    %315 = vsyncpa %s314, 1
    %316 = vsyncpa [#allocation6], 1
    %s317 = scalar_lea.sflag [#allocation6], 1
    %318 = vsyncpa %s317, 1

</llo_original>
